<compile_context>
chip_gen: v6e
topology: v6e:2x2x1
jax: 0.10.0
libtpu: 0.0.40
codegen_flags: <defaults>
</compile_context>

<pallas_src>
import jax
import jax.numpy as jnp
from jax.experimental import pallas as pl
from jax.experimental.pallas import tpu as pltpu

_OUT_LANES = 128  # lane-dense output slab width


def _round_up(a, b):
    return (a + b - 1) // b * b


def _regnn_kernel(x_ref,
                  w1_ref, b1_ref,
                  w2_ref, b2_ref,
                  w3_ref, b3_ref,
                  w4_ref, b4_ref,
                  o_ref):
    """tanh(xW1+b1) -> tanh(.W2+b2) -> tanh(.W3+b3) -> VPU dot with w4 row + b4."""
    # Hidden layers: bf16 MXU operands, f32 accumulation; bias + tanh in f32
    # (f32 elementwise keeps the v5e VPU/EUP fast path, EUP tanh is a free slot).
    h = jnp.tanh(jnp.dot(x_ref[...], w1_ref[...],
                         preferred_element_type=jnp.float32) + b1_ref[...])
    h = jnp.tanh(jnp.dot(h.astype(jnp.bfloat16), w2_ref[...],
                         preferred_element_type=jnp.float32) + b2_ref[...])
    h = jnp.tanh(jnp.dot(h.astype(jnp.bfloat16), w3_ref[...],
                         preferred_element_type=jnp.float32) + b3_ref[...])
    # Final Linear(dim_h, 1): an N=1 MXU matmul would use 1 output column and
    # produce a 1-lane result — do it as broadcast-multiply + lane reduce.
    # w4_ref is the PyTorch [out, in] = [1, dim_h] row (f32), b4_ref is [1, 1].
    y = jnp.sum(h * w4_ref[...], axis=-1, keepdims=True) + b4_ref[...]
    # Lane-dense store: broadcast the regression value across 128 lanes so the
    # store is an unmasked vst; the wrapper slices [:, :1].
    o_ref[...] = jnp.broadcast_to(y, o_ref.shape).astype(o_ref.dtype)
    # TODO(synk): Dropout(prob_dropout) omitted — identity for p=0 / eval mode.
    #             (Training-mode dropout would use pltpu.prng_seed + stateful_bernoulli.)


@jax.jit
def regnn_forward(x, params):
    """params = ((W1,b1),(W2,b2),(W3,b3),(W4,b4)); Wi=[in,out] for hidden layers,
    W4=[1,dim_h] (PyTorch row layout), bi=[1,out]. Returns [batch, 1] float32."""
    (w1, b1), (w2, b2), (w3, b3), (w4, b4) = params
    batch, dim_x = x.shape
    dim_h = w1.shape[1]

    # Batch tiling: tm up to 256 rows (multiple of 8 sublanes); pad the batch to
    # a multiple of tm (padded rows produce garbage that is sliced away).
    tm = min(256, _round_up(batch, 8))
    padded = _round_up(batch, tm)
    if padded != batch:
        x = jnp.pad(x, ((0, padded - batch), (0, 0)))
    nblk = padded // tm

    # bf16 MXU operands (f32 accumulation happens in-kernel); halves x / hidden
    # weight DMA bytes. Final-layer params stay f32 (VPU/XLU path).
    x_bf16 = x.astype(jnp.bfloat16)
    w1b, w2b, w3b = (w.astype(jnp.bfloat16) for w in (w1, w2, w3))

    const = lambda a: pl.BlockSpec(a.shape, lambda i: (0,) * a.ndim)

    out = pl.pallas_call(
        _regnn_kernel,
        out_shape=jax.ShapeDtypeStruct((padded, _OUT_LANES), jnp.float32),
        grid=(nblk,),
        in_specs=[pl.BlockSpec((tm, dim_x), lambda i: (i, 0)),
                  const(w1b), const(b1),
                  const(w2b), const(b2),
                  const(w3b), const(b3),
                  const(w4), const(b4)],
        out_specs=pl.BlockSpec((tm, _OUT_LANES), lambda i: (i, 0)),
        compiler_params=pltpu.CompilerParams(
            dimension_semantics=("parallel",),   # batch axis: megacore / 2 TCs on v7x
            vmem_limit_bytes=4 << 20,            # actual need is well under 1 MiB
        ),
    )(x_bf16, w1b, b1, w2b, b2, w3b, b3, w4, b4)

    return out[:batch, :1]


def init_regnn_params(key, dim_x, dim_h, dtype=jnp.float32):
    """PyTorch-style init: U(-1/sqrt(fan_in), 1/sqrt(fan_in)). n_layers fixed at 3."""
    params = []
    for fan_in, fan_out in [(dim_x, dim_h), (dim_h, dim_h), (dim_h, dim_h)]:
        key, kw, kb = jax.random.split(key, 3)
        bound = fan_in ** -0.5
        w = jax.random.uniform(kw, (fan_in, fan_out), dtype, -bound, bound)  # [in, out]
        b = jax.random.uniform(kb, (1, fan_out), dtype, -bound, bound)
        params.append((w, b))
    key, kw, kb = jax.random.split(key, 3)
    bound = dim_h ** -0.5
    w4 = jax.random.uniform(kw, (1, dim_h), dtype, -bound, bound)  # PyTorch [out,in] row
    b4 = jax.random.uniform(kb, (1, 1), dtype, -bound, bound)
    params.append((w4, b4))
    return tuple(params)


def regnn_reference_matched(x, params):
    """Pure-JAX reference with the SAME numerics as the kernel (bf16 dot operands,
    f32 accumulate, f32 tanh/bias, VPU-style final reduce)."""
    (w1, b1), (w2, b2), (w3, b3), (w4, b4) = params
    h_bf16 = x.astype(jnp.bfloat16)
    h_f32 = None
    for w, b in ((w1, b1), (w2, b2), (w3, b3)):
        h_f32 = jnp.tanh(jnp.dot(h_bf16, w.astype(jnp.bfloat16),
                                 preferred_element_type=jnp.float32) + b)
        h_bf16 = h_f32.astype(jnp.bfloat16)
    return jnp.sum(h_f32 * w4, axis=-1, keepdims=True) + b4


def regnn_reference_f32(x, params):
    """Pure-f32 reference matching the PyTorch forward semantics exactly."""
    (w1, b1), (w2, b2), (w3, b3), (w4, b4) = params
    h = x
    for w, b in ((w1, b1), (w2, b2), (w3, b3)):
        h = jnp.tanh(h @ w + b)
    return jnp.sum(h * w4, axis=-1, keepdims=True) + b4


if __name__ == "__main__":
    # Small shapes consistent with the module: batch=8, dim_x=16, hidden=32, n_layers=3.
    batch, dim_x, dim_h = 8, 16, 32

    key = jax.random.PRNGKey(0)
    key, kx = jax.random.split(key)
    x = jax.random.normal(kx, (batch, dim_x), jnp.float32)

    params = init_regnn_params(key, dim_x, dim_h)

    y = regnn_forward(x, params)
    jax.block_until_ready(y)
    assert y.shape == (batch, 1), y.shape

    # Tight check vs. the numerically-matched reference (same bf16/f32 mix).
    y_ref = regnn_reference_matched(x, params)
    assert jnp.allclose(y, y_ref, atol=1e-4, rtol=1e-4), \
        f"max err vs matched ref: {jnp.max(jnp.abs(y - y_ref))}"

    # Loose semantic check vs. the pure-f32 PyTorch-equivalent forward.
    y_f32 = regnn_reference_f32(x, params)
    assert jnp.allclose(y, y_f32, atol=3e-2, rtol=3e-2), \
        f"max err vs f32 ref: {jnp.max(jnp.abs(y - y_f32))}"

    print("KERNEL_OK")
</pallas_src>

<mosaic_0001>
module attributes {stable_mosaic.version = 11 : i64} {
  func.func @_regnn_kernel(%arg0: i32, %arg1: memref<8x16xbf16, #tpu.memory_space<vmem>>, %arg2: memref<16x32xbf16, #tpu.memory_space<vmem>>, %arg3: memref<1x32xf32, #tpu.memory_space<vmem>>, %arg4: memref<32x32xbf16, #tpu.memory_space<vmem>>, %arg5: memref<1x32xf32, #tpu.memory_space<vmem>>, %arg6: memref<32x32xbf16, #tpu.memory_space<vmem>>, %arg7: memref<1x32xf32, #tpu.memory_space<vmem>>, %arg8: memref<1x32xf32, #tpu.memory_space<vmem>>, %arg9: memref<1x1xf32, #tpu.memory_space<vmem>>, %arg10: memref<8x128xf32, #tpu.memory_space<vmem>>) attributes {dimension_semantics = [#tpu.dimension_semantics<parallel>], iteration_bounds = array<i64: 1>, scalar_prefetch = 0 : i64, scratch_operands = 0 : i64, tpu.core_type = #tpu.core_type<tc>, window_params = [{transform_indices = @transform_0, window_bounds = array<i64: 8, 16>}, {pipeline_mode = #tpu.pipeline_mode<synchronous>, transform_indices = @transform_1, window_bounds = array<i64: 16, 32>}, {pipeline_mode = #tpu.pipeline_mode<synchronous>, transform_indices = @transform_2, window_bounds = array<i64: 1, 32>}, {pipeline_mode = #tpu.pipeline_mode<synchronous>, transform_indices = @transform_3, window_bounds = array<i64: 32, 32>}, {pipeline_mode = #tpu.pipeline_mode<synchronous>, transform_indices = @transform_4, window_bounds = array<i64: 1, 32>}, {pipeline_mode = #tpu.pipeline_mode<synchronous>, transform_indices = @transform_5, window_bounds = array<i64: 32, 32>}, {pipeline_mode = #tpu.pipeline_mode<synchronous>, transform_indices = @transform_6, window_bounds = array<i64: 1, 32>}, {pipeline_mode = #tpu.pipeline_mode<synchronous>, transform_indices = @transform_7, window_bounds = array<i64: 1, 32>}, {pipeline_mode = #tpu.pipeline_mode<synchronous>, transform_indices = @transform_8, window_bounds = array<i64: 1, 1>}, {transform_indices = @transform_9, window_bounds = array<i64: 8, 128>}]} {
    %c0 = arith.constant 0 : index
    %c0_0 = arith.constant 0 : index
    %0 = vector.load %arg1[%c0, %c0_0] : memref<8x16xbf16, #tpu.memory_space<vmem>>, vector<8x16xbf16>
    %c0_1 = arith.constant 0 : index
    %c0_2 = arith.constant 0 : index
    %1 = vector.load %arg2[%c0_1, %c0_2] : memref<16x32xbf16, #tpu.memory_space<vmem>>, vector<16x32xbf16>
    %cst = arith.constant dense<0.000000e+00> : vector<8x32xf32>
    %2 = tpu.matmul %0, %1, %cst {dimension_numbers = #tpu.dot_dimension_numbers<[1], [0], [0], [1], [0, 0, 1, 1], [], []>} : vector<8x16xbf16>, vector<16x32xbf16>, vector<8x32xf32> -> vector<8x32xf32>
    %c0_3 = arith.constant 0 : index
    %c0_4 = arith.constant 0 : index
    %3 = vector.load %arg3[%c0_3, %c0_4] : memref<1x32xf32, #tpu.memory_space<vmem>>, vector<1x32xf32>
    %4 = vector.broadcast %3 : vector<1x32xf32> to vector<8x32xf32>
    %5 = arith.addf %2, %4 : vector<8x32xf32>
    %6 = math.tanh %5 : vector<8x32xf32>
    %7 = arith.truncf %6 : vector<8x32xf32> to vector<8x32xbf16>
    %c0_5 = arith.constant 0 : index
    %c0_6 = arith.constant 0 : index
    %8 = vector.load %arg4[%c0_5, %c0_6] : memref<32x32xbf16, #tpu.memory_space<vmem>>, vector<32x32xbf16>
    %cst_7 = arith.constant dense<0.000000e+00> : vector<8x32xf32>
    %9 = tpu.matmul %7, %8, %cst_7 {dimension_numbers = #tpu.dot_dimension_numbers<[1], [0], [0], [1], [0, 0, 1, 1], [], []>} : vector<8x32xbf16>, vector<32x32xbf16>, vector<8x32xf32> -> vector<8x32xf32>
    %c0_8 = arith.constant 0 : index
    %c0_9 = arith.constant 0 : index
    %10 = vector.load %arg5[%c0_8, %c0_9] : memref<1x32xf32, #tpu.memory_space<vmem>>, vector<1x32xf32>
    %11 = vector.broadcast %10 : vector<1x32xf32> to vector<8x32xf32>
    %12 = arith.addf %9, %11 : vector<8x32xf32>
    %13 = math.tanh %12 : vector<8x32xf32>
    %14 = arith.truncf %13 : vector<8x32xf32> to vector<8x32xbf16>
    %c0_10 = arith.constant 0 : index
    %c0_11 = arith.constant 0 : index
    %15 = vector.load %arg6[%c0_10, %c0_11] : memref<32x32xbf16, #tpu.memory_space<vmem>>, vector<32x32xbf16>
    %cst_12 = arith.constant dense<0.000000e+00> : vector<8x32xf32>
    %16 = tpu.matmul %14, %15, %cst_12 {dimension_numbers = #tpu.dot_dimension_numbers<[1], [0], [0], [1], [0, 0, 1, 1], [], []>} : vector<8x32xbf16>, vector<32x32xbf16>, vector<8x32xf32> -> vector<8x32xf32>
    %c0_13 = arith.constant 0 : index
    %c0_14 = arith.constant 0 : index
    %17 = vector.load %arg7[%c0_13, %c0_14] : memref<1x32xf32, #tpu.memory_space<vmem>>, vector<1x32xf32>
    %18 = vector.broadcast %17 : vector<1x32xf32> to vector<8x32xf32>
    %19 = arith.addf %16, %18 : vector<8x32xf32>
    %20 = math.tanh %19 : vector<8x32xf32>
    %c0_15 = arith.constant 0 : index
    %c0_16 = arith.constant 0 : index
    %21 = vector.load %arg8[%c0_15, %c0_16] : memref<1x32xf32, #tpu.memory_space<vmem>>, vector<1x32xf32>
    %22 = vector.broadcast %21 : vector<1x32xf32> to vector<8x32xf32>
    %23 = arith.mulf %20, %22 : vector<8x32xf32>
    %cst_17 = arith.constant dense<0.000000e+00> : vector<8xf32>
    %24 = vector.multi_reduction <add>, %23, %cst_17 [1] : vector<8x32xf32> to vector<8xf32>
    %25 = vector.shape_cast %24 : vector<8xf32> to vector<8x1xf32>
    %c0_18 = arith.constant 0 : index
    %c0_19 = arith.constant 0 : index
    %26 = vector.load %arg9[%c0_18, %c0_19] : memref<1x1xf32, #tpu.memory_space<vmem>>, vector<1x1xf32>
    %27 = vector.broadcast %26 : vector<1x1xf32> to vector<8x1xf32>
    %28 = arith.addf %25, %27 : vector<8x1xf32>
    %29 = vector.shape_cast %28 : vector<8x1xf32> to vector<8x1xf32>
    %30 = vector.broadcast %29 : vector<8x1xf32> to vector<8x128xf32>
    %c0_20 = arith.constant 0 : index
    %c0_21 = arith.constant 0 : index
    %31 = vector.load %arg10[%c0_20, %c0_21] : memref<8x128xf32, #tpu.memory_space<vmem>>, vector<8x128xf32>
    tpu.vector_store %arg10[%c0_20, %c0_21], %30 {strides = array<i32>} : memref<8x128xf32, #tpu.memory_space<vmem>>, vector<8x128xf32>,
    return
  }
  func.func @transform_0(%arg0: i32) -> (i32, i32) {
    %c0_i32 = arith.constant 0 : i32
    %c0_i32_0 = arith.constant 0 : i32
    return %arg0, %c0_i32 : i32, i32
  }
  func.func @transform_1(%arg0: i32) -> (i32, i32) {
    %c0_i32 = arith.constant 0 : i32
    %c0_i32_0 = arith.constant 0 : i32
    %c0_i32_1 = arith.constant 0 : i32
    return %c0_i32, %c0_i32_0 : i32, i32
  }
  func.func @transform_2(%arg0: i32) -> (i32, i32) {
    %c0_i32 = arith.constant 0 : i32
    %c0_i32_0 = arith.constant 0 : i32
    %c0_i32_1 = arith.constant 0 : i32
    return %c0_i32, %c0_i32_0 : i32, i32
  }
  func.func @transform_3(%arg0: i32) -> (i32, i32) {
    %c0_i32 = arith.constant 0 : i32
    %c0_i32_0 = arith.constant 0 : i32
    %c0_i32_1 = arith.constant 0 : i32
    return %c0_i32, %c0_i32_0 : i32, i32
  }
  func.func @transform_4(%arg0: i32) -> (i32, i32) {
    %c0_i32 = arith.constant 0 : i32
    %c0_i32_0 = arith.constant 0 : i32
    %c0_i32_1 = arith.constant 0 : i32
    return %c0_i32, %c0_i32_0 : i32, i32
  }
  func.func @transform_5(%arg0: i32) -> (i32, i32) {
    %c0_i32 = arith.constant 0 : i32
    %c0_i32_0 = arith.constant 0 : i32
    %c0_i32_1 = arith.constant 0 : i32
    return %c0_i32, %c0_i32_0 : i32, i32
  }
  func.func @transform_6(%arg0: i32) -> (i32, i32) {
    %c0_i32 = arith.constant 0 : i32
    %c0_i32_0 = arith.constant 0 : i32
    %c0_i32_1 = arith.constant 0 : i32
    return %c0_i32, %c0_i32_0 : i32, i32
  }
  func.func @transform_7(%arg0: i32) -> (i32, i32) {
    %c0_i32 = arith.constant 0 : i32
    %c0_i32_0 = arith.constant 0 : i32
    %c0_i32_1 = arith.constant 0 : i32
    return %c0_i32, %c0_i32_0 : i32, i32
  }
  func.func @transform_8(%arg0: i32) -> (i32, i32) {
    %c0_i32 = arith.constant 0 : i32
    %c0_i32_0 = arith.constant 0 : i32
    %c0_i32_1 = arith.constant 0 : i32
    return %c0_i32, %c0_i32_0 : i32, i32
  }
  func.func @transform_9(%arg0: i32) -> (i32, i32) {
    %c0_i32 = arith.constant 0 : i32
    %c0_i32_0 = arith.constant 0 : i32
    return %arg0, %c0_i32 : i32, i32
  }
}

</mosaic_0001>

<llo_original>
// kernel: regnn_forward.1
$region0: #{regnn_forward.1}
  #allocation0 [shape = 'u32[]', space=smem, size = 0x4, offset = 0x4, fixed_abs, tag = 'smem constant byte address 0x4 - core index']
  #allocation1 [shape = 'u32[144,128]{1,0:T(1,128)}', space=vmem, size = 0x12000, scoped, tag = 'internal scratch']
  #allocation2 [shape = 'f32[1,1]{1,0:T(1,128)S(1)}', space=vmem, size = 0x200, scoped, tag = 'scoped memory for regnn_forward.1']
  %s0 = inlined_call_operand.vmem [shape: bf16[8,16], index: 0, kind: input, shape index: {}]
  %s1 = inlined_call_operand.vmem [shape: bf16[16,32], index: 1, kind: input, shape index: {}]
  %s2 = inlined_call_operand.vmem [shape: f32[1,32], index: 2, kind: input, shape index: {}]
  %s3 = inlined_call_operand.vmem [shape: bf16[32,32], index: 3, kind: input, shape index: {}]
  %s4 = inlined_call_operand.vmem [shape: f32[1,32], index: 4, kind: input, shape index: {}]
  %s5 = inlined_call_operand.vmem [shape: bf16[32,32], index: 5, kind: input, shape index: {}]
  %s6 = inlined_call_operand.vmem [shape: f32[1,32], index: 6, kind: input, shape index: {}]
  %s7 = inlined_call_operand.vmem [shape: f32[1,32], index: 7, kind: input, shape index: {}]
  %s8 = inlined_call_operand.<no memory space> [shape: f32[1,1], index: 8, kind: input, shape index: {}]
  %s9 = inlined_call_operand.vmem [shape: f32[8,128], index: 9, kind: output, shape index: {}]
  %s10 = sld [smem:[#allocation0]]
  $region46: #{regnn_forward.1} parent=0
    _
  %s12 = ssub.s32 1, %s10
  %s13 = scalar_select 0, %s12, %s10
  %v14 = vstv %s8
  %15 = vst [vmem:[#allocation2] sm:$0x1] %v14
  // Predicated region
  $region2: #{regnn_forward.1} parent=0 // pred_check
    _
  $region3: #{regnn_forward.1} parent=0 // pred_check_branch
    %17 = sbr.rel (0) target = $region5
  $region4: #{regnn_forward.1} parent=0 // pred_region
    _
  $region5: #{regnn_forward.1} parent=0 // pred_fallthru
    _
  // Predicated region
  $region6: #{regnn_forward.1} parent=0 // pred_check
    _
  $region7: #{regnn_forward.1} parent=0 // pred_check_branch
    %19 = sbr.rel (0) target = $region9
  $region8: #{regnn_forward.1} parent=0 // pred_region
    _
  $region9: #{regnn_forward.1} parent=0 // pred_fallthru
    _
  // Predicated region
  $region10: #{regnn_forward.1} parent=0 // pred_check
    _
  $region11: #{regnn_forward.1} parent=0 // pred_check_branch
    %21 = sbr.rel (0) target = $region13
  $region12: #{regnn_forward.1} parent=0 // pred_region
    _
  $region13: #{regnn_forward.1} parent=0 // pred_fallthru
    _
  // Predicated region
  $region14: #{regnn_forward.1} parent=0 // pred_check
    _
  $region15: #{regnn_forward.1} parent=0 // pred_check_branch
    %23 = sbr.rel (0) target = $region17
  $region16: #{regnn_forward.1} parent=0 // pred_region
    _
  $region17: #{regnn_forward.1} parent=0 // pred_fallthru
    _
  // Predicated region
  $region18: #{regnn_forward.1} parent=0 // pred_check
    _
  $region19: #{regnn_forward.1} parent=0 // pred_check_branch
    %25 = sbr.rel (0) target = $region21
  $region20: #{regnn_forward.1} parent=0 // pred_region
    _
  $region21: #{regnn_forward.1} parent=0 // pred_fallthru
    _
  // Predicated region
  $region22: #{regnn_forward.1} parent=0 // pred_check
    _
  $region23: #{regnn_forward.1} parent=0 // pred_check_branch
    %27 = sbr.rel (0) target = $region25
  $region24: #{regnn_forward.1} parent=0 // pred_region
    _
  $region25: #{regnn_forward.1} parent=0 // pred_fallthru
    _
  // Predicated region
  $region26: #{regnn_forward.1} parent=0 // pred_check
    _
  $region27: #{regnn_forward.1} parent=0 // pred_check_branch
    %29 = sbr.rel (0) target = $region29
  $region28: #{regnn_forward.1} parent=0 // pred_region
    _
  $region29: #{regnn_forward.1} parent=0 // pred_fallthru
    _
  // Predicated region
  $region30: #{regnn_forward.1} parent=0 // pred_check
    _
  $region31: #{regnn_forward.1} parent=0 // pred_check_branch
    %31 = sbr.rel (0) target = $region33
  $region32: #{regnn_forward.1} parent=0 // pred_region
    _
  $region33: #{regnn_forward.1} parent=0 // pred_fallthru
    _
  // Predicated region
  $region34: #{regnn_forward.1} parent=0 // pred_check
    _
  $region35: #{regnn_forward.1} parent=0 // pred_check_branch
    %33 = sbr.rel (0) target = $region37
  $region36: #{regnn_forward.1} parent=0 // pred_region
    _
  $region37: #{regnn_forward.1} parent=0 // pred_fallthru
    _
  %v35 = vld [vmem:[%s0] sm:$0xf]
  %v36 = vld [vmem:[%s1] sm:$0xf]
  %v37 = vld [vmem:[%s1 + $0x4] sm:$0xf]
  %v38 = vld [vmem:[%s2] sm:$0x1]
  %v40 = vlaneseq
  %v41 = vshrl.u32 %v40, 7
  %v42 = vsub.s32 0, %v41
  %v43 = vrot.slane %v38, %v42
  %v47 = vunpack.c.l.b16 %v36
  %v48 = vunpack.c.l.b16 %v37
  %v49 = vpack.c.b16 %v48, %v47
  %vm51 = vcmask 130048
  %v53 = vsel %vm51, %v35, 0
  %55 = vmatprep.subr.bf16.mxu0 0
  %56 = vmatpush1.bf16.msra.mxu0 0
  %57 = vmatprep.subr.bf16.mxu0 0
  %58 = vmatpush1.bf16.msra.mxu0 0
  %59 = vmatprep.subr.bf16.mxu0 0
  %60 = vmatpush1.bf16.msra.mxu0 0
  %61 = vmatprep.subr.bf16.mxu0 0
  %62 = vmatpush1.bf16.msra.mxu0 0
  %63 = vmatprep.subr.bf16.mxu0 0
  %64 = vmatpush1.bf16.msra.mxu0 0
  %65 = vmatprep.subr.bf16.mxu0 0
  %66 = vmatpush1.bf16.msra.mxu0 0
  %67 = vmatprep.subr.bf16.mxu0 0
  %68 = vmatpush1.bf16.msra.mxu0 0
  %69 = vmatprep.subr.bf16.mxu0 0
  %70 = vmatpush1.bf16.msra.mxu0 %v49
  %71 = vmatprep.subr.bf16.mxu0 0
  %72 = vmatpush2.bf16.msra.mxu0 0
  %73 = vmatprep.subr.bf16.mxu0 0
  %74 = vmatpush2.bf16.msra.mxu0 0
  %75 = vmatprep.subr.bf16.mxu0 0
  %76 = vmatpush2.bf16.msra.mxu0 0
  %77 = vmatprep.subr.bf16.mxu0 0
  %78 = vmatpush2.bf16.msra.mxu0 0
  %79 = vmatprep.subr.bf16.mxu0 0
  %80 = vmatpush2.bf16.msra.mxu0 0
  %81 = vmatprep.subr.bf16.mxu0 0
  %82 = vmatpush2.bf16.msra.mxu0 0
  %83 = vmatprep.subr.bf16.mxu0 0
  %84 = vmatpush2.bf16.msra.mxu0 0
  %85 = vmatprep.subr.bf16.mxu0 0
  %86 = vmatpush2.bf16.msra.mxu0 0
  %87 = vmatprep.mubr.bf16.mxu0 0
  %88 = vmatmul.mubr.bf16.gmra.mxu0 %v53
  %v89 = vpop.f32.mrf.mxu0
  %v90 = vadd.f32 %v43, %v89
  %v91 = vpop.f32.mrf.mxu0
  %v92 = vpop.f32.mrf.mxu0
  %v93 = vpop.f32.mrf.mxu0
  %94 = vdwg.mxu0
  %v95 = vtanh.pop %v90
  %v96 = vpack.c.bf16 %v95, %v95
  %v97 = vld [vmem:[%s3] sm:$0xf]
  %v98 = vld [vmem:[%s3 + $0x4] sm:$0xf]
  %v99 = vld [vmem:[%s3 + $0x8] sm:$0xf]
  %v100 = vld [vmem:[%s3 + $0xc] sm:$0xf]
  %v101 = vld [vmem:[%s4] sm:$0x1]
  %v103 = vlaneseq
  %v104 = vshrl.u32 %v103, 7
  %v105 = vsub.s32 0, %v104
  %v106 = vrot.slane %v101, %v105
  %v112 = vunpack.c.l.b16 %v97
  %v113 = vunpack.c.l.b16 %v98
  %v114 = vunpack.c.l.b16 %v99
  %v115 = vunpack.c.l.b16 %v100
  %v116 = vpack.c.b16 %v113, %v112
  %v117 = vpack.c.b16 %v115, %v114
  %vm120 = vcmask 261120
  %v122 = vsel %vm120, %v96, 0
  %124 = vmatprep.subr.bf16.mxu0 0
  %125 = vmatpush1.bf16.msra.mxu0 0
  %126 = vmatprep.subr.bf16.mxu0 0
  %127 = vmatpush1.bf16.msra.mxu0 0
  %128 = vmatprep.subr.bf16.mxu0 0
  %129 = vmatpush1.bf16.msra.mxu0 0
  %130 = vmatprep.subr.bf16.mxu0 0
  %131 = vmatpush1.bf16.msra.mxu0 0
  %132 = vmatprep.subr.bf16.mxu0 0
  %133 = vmatpush1.bf16.msra.mxu0 0
  %134 = vmatprep.subr.bf16.mxu0 0
  %135 = vmatpush1.bf16.msra.mxu0 0
  %136 = vmatprep.subr.bf16.mxu0 0
  %137 = vmatpush1.bf16.msra.mxu0 %v117
  %138 = vmatprep.subr.bf16.mxu0 0
  %139 = vmatpush1.bf16.msra.mxu0 %v116
  %140 = vmatprep.subr.bf16.mxu0 0
  %141 = vmatpush2.bf16.msra.mxu0 0
  %142 = vmatprep.subr.bf16.mxu0 0
  %143 = vmatpush2.bf16.msra.mxu0 0
  %144 = vmatprep.subr.bf16.mxu0 0
  %145 = vmatpush2.bf16.msra.mxu0 0
  %146 = vmatprep.subr.bf16.mxu0 0
  %147 = vmatpush2.bf16.msra.mxu0 0
  %148 = vmatprep.subr.bf16.mxu0 0
  %149 = vmatpush2.bf16.msra.mxu0 0
  %150 = vmatprep.subr.bf16.mxu0 0
  %151 = vmatpush2.bf16.msra.mxu0 0
  %152 = vmatprep.subr.bf16.mxu0 0
  %153 = vmatpush2.bf16.msra.mxu0 0
  %154 = vmatprep.subr.bf16.mxu0 0
  %155 = vmatpush2.bf16.msra.mxu0 0
  %156 = vmatprep.mubr.bf16.mxu0 0
  %157 = vmatmul.mubr.bf16.gmra.mxu0 %v122
  %v158 = vpop.f32.mrf.mxu0
  %v159 = vadd.f32 %v106, %v158
  %v160 = vpop.f32.mrf.mxu0
  %v161 = vpop.f32.mrf.mxu0
  %v162 = vpop.f32.mrf.mxu0
  %163 = vdwg.mxu0
  %v164 = vtanh.pop %v159
  %v165 = vpack.c.bf16 %v164, %v164
  %v166 = vld [vmem:[%s5] sm:$0xf]
  %v167 = vld [vmem:[%s5 + $0x4] sm:$0xf]
  %v168 = vld [vmem:[%s5 + $0x8] sm:$0xf]
  %v169 = vld [vmem:[%s5 + $0xc] sm:$0xf]
  %v170 = vld [vmem:[%s6] sm:$0x1]
  %v172 = vlaneseq
  %v173 = vshrl.u32 %v172, 7
  %v174 = vsub.s32 0, %v173
  %v175 = vrot.slane %v170, %v174
  %v181 = vunpack.c.l.b16 %v166
  %v182 = vunpack.c.l.b16 %v167
  %v183 = vunpack.c.l.b16 %v168
  %v184 = vunpack.c.l.b16 %v169
  %v185 = vpack.c.b16 %v182, %v181
  %v186 = vpack.c.b16 %v184, %v183
  %v190 = vsel %vm120, %v165, 0
  %192 = vmatprep.subr.bf16.mxu0 0
  %193 = vmatpush1.bf16.msra.mxu0 0
  %194 = vmatprep.subr.bf16.mxu0 0
  %195 = vmatpush1.bf16.msra.mxu0 0
  %196 = vmatprep.subr.bf16.mxu0 0
  %197 = vmatpush1.bf16.msra.mxu0 0
  %198 = vmatprep.subr.bf16.mxu0 0
  %199 = vmatpush1.bf16.msra.mxu0 0
  %200 = vmatprep.subr.bf16.mxu0 0
  %201 = vmatpush1.bf16.msra.mxu0 0
  %202 = vmatprep.subr.bf16.mxu0 0
  %203 = vmatpush1.bf16.msra.mxu0 0
  %204 = vmatprep.subr.bf16.mxu0 0
  %205 = vmatpush1.bf16.msra.mxu0 %v186
  %206 = vmatprep.subr.bf16.mxu0 0
  %207 = vmatpush1.bf16.msra.mxu0 %v185
  %208 = vmatprep.subr.bf16.mxu0 0
  %209 = vmatpush2.bf16.msra.mxu0 0
  %210 = vmatprep.subr.bf16.mxu0 0
  %211 = vmatpush2.bf16.msra.mxu0 0
  %212 = vmatprep.subr.bf16.mxu0 0
  %213 = vmatpush2.bf16.msra.mxu0 0
  %214 = vmatprep.subr.bf16.mxu0 0
  %215 = vmatpush2.bf16.msra.mxu0 0
  %216 = vmatprep.subr.bf16.mxu0 0
  %217 = vmatpush2.bf16.msra.mxu0 0
  %218 = vmatprep.subr.bf16.mxu0 0
  %219 = vmatpush2.bf16.msra.mxu0 0
  %220 = vmatprep.subr.bf16.mxu0 0
  %221 = vmatpush2.bf16.msra.mxu0 0
  %222 = vmatprep.subr.bf16.mxu0 0
  %223 = vmatpush2.bf16.msra.mxu0 0
  %224 = vmatprep.mubr.bf16.mxu0 0
  %225 = vmatmul.mubr.bf16.gmra.mxu0 %v190
  %v226 = vpop.f32.mrf.mxu0
  %v227 = vadd.f32 %v175, %v226
  %v228 = vpop.f32.mrf.mxu0
  %v229 = vpop.f32.mrf.mxu0
  %v230 = vpop.f32.mrf.mxu0
  %231 = vdwg.mxu0
  %v232 = vtanh.pop %v227
  %v233 = vld [vmem:[%s7] sm:$0x1]
  %v235 = vlaneseq
  %v236 = vshrl.u32 %v235, 7
  %v237 = vsub.s32 0, %v236
  %v238 = vrot.slane %v233, %v237
  %v240 = vmul.f32 %v232, %v238
  %v241 = vsel %vm120, %v240, 0.0
  %242 = vadd.xlane.f32.xlu0 %v241
  %v243 = vpop.xlane.xlu0 %242
  %v244 = vld [vmem:[#allocation2] sm:$0x1]
  %v246 = vlaneseq
  %v247 = vshrl.u32 %v246, 7
  %v248 = vsub.s32 0, %v247
  %v249 = vrot.slane %v244, %v248
  %v251 = vadd.f32 %v243, %v249
  %253 = vset.pattern.permute.xlu0 0
  %254 = vperm.xlu0 %253, %v251
  %v255 = vpop.permute.xlu0 %254
  %257 = vst [vmem:[%s9] sm:$0xff] %v255
  // Predicated region
  $region38: #{regnn_forward.1} parent=0 // pred_check
    _
  $region39: #{regnn_forward.1} parent=0 // pred_check_branch
    %259 = sbr.rel (0) target = $region41
  $region40: #{regnn_forward.1} parent=0 // pred_region
    _
  $region41: #{regnn_forward.1} parent=0 // pred_fallthru
    _
  // Predicated region
  $region42: #{regnn_forward.1} parent=0 // pred_check
    _
  $region43: #{regnn_forward.1} parent=0 // pred_check_branch
    %261 = sbr.rel (0) target = $region45
  $region44: #{regnn_forward.1} parent=0 // pred_region
    _
  $region45: #{regnn_forward.1} parent=0 // pred_fallthru
    _

</llo_original>
